<compile_context>
chip_gen: v5e
topology: v5e:2x2
jax: 0.10.0
libtpu: 0.0.40
codegen_flags: <defaults>
</compile_context>

<pallas_src>
import functools

import jax
import jax.numpy as jnp
from jax.experimental import pallas as pl
from jax.experimental.pallas import tpu as pltpu


def _round_up(x: int, m: int) -> int:
    return ((x + m - 1) // m) * m


def _choose_tile_b(B: int, D: int, itemsize: int) -> int:
    """Largest batch-tile (multiple of 8) whose pipelined footprint fits VMEM.

    3 inputs x 2 pipeline buffers x (TB * D * itemsize) bytes must stay well
    under the scoped VMEM default (16 MiB on v5e, 32 MiB on v6e/v7x), so we
    budget ~12 MiB and cap the tile at 1024 rows.
    """
    budget = 12 * 1024 * 1024
    bytes_per_row = 3 * 2 * D * itemsize
    rows = max(8, budget // max(bytes_per_row, 1))
    tb = min(1024, (rows // 8) * 8)
    tb = max(8, tb)
    # Never use a tile larger than the (8-rounded) batch itself.
    return min(tb, _round_up(B, 8))


def _triplet_kernel(x_ref, p_ref, n_ref, out_ref, pos_acc, neg_acc,
                    *, alpha, beta, batch_size, tile_b):
    i = pl.program_id(0)

    @pl.when(i == 0)
    def _init():
        pos_acc[...] = jnp.zeros_like(pos_acc)
        neg_acc[...] = jnp.zeros_like(neg_acc)

    # Load in the input dtype (keeps HBM traffic minimal for bf16 inputs),
    # upcast in-register for the squared-difference accumulation.
    x = x_ref[...].astype(jnp.float32)
    p = p_ref[...].astype(jnp.float32)
    n = n_ref[...].astype(jnp.float32)

    dp = x - p
    dn = x - n

    # Per-row sum of squares over the feature (lane) axis -> (TB, 1).
    pos_sq = jnp.sum(dp * dp, axis=1, keepdims=True)
    neg_sq = jnp.sum(dn * dn, axis=1, keepdims=True)

    # Mask out padded rows of a partial last tile (B % TB != 0).
    row = i * tile_b + jax.lax.broadcasted_iota(jnp.int32, (tile_b, 1), 0)
    valid = row < batch_size
    pos = jnp.where(valid, jnp.sqrt(pos_sq), 0.0)   # (TB, 1)
    neg = jnp.where(valid, jnp.sqrt(neg_sq), 0.0)   # (TB, 1)

    pos_acc[...] += jnp.sum(pos, axis=(0, 1), keepdims=True)
    neg_acc[...] += jnp.sum(neg, axis=(0, 1), keepdims=True)

    @pl.when(i == pl.num_programs(0) - 1)
    def _finalize():
        inv_b = jnp.float32(1.0 / batch_size)
        pos_dist = pos_acc[...] * inv_b            # (1, 1)
        neg_dist = neg_acc[...] * inv_b            # (1, 1)
        loss = jnp.maximum(pos_dist - neg_dist + alpha, 0.0)
        loss = loss + jnp.maximum(pos_dist - beta, 0.0)
        out_ref[...] = loss


def triplet_loss(x, p, n, alpha: float = 1.0, beta: float = 0.1):
    """Pallas TPU implementation of TripletLoss.forward.

    x, p, n: (B, D) arrays.  Returns a float32 scalar.
    """
    assert x.shape == p.shape == n.shape
    B, D = x.shape
    itemsize = jnp.dtype(x.dtype).itemsize
    tb = _choose_tile_b(B, D, itemsize)
    grid_b = pl.cdiv(B, tb)

    kernel = functools.partial(
        _triplet_kernel,
        alpha=float(alpha),
        beta=float(beta),
        batch_size=B,
        tile_b=tb,
    )

    in_spec = pl.BlockSpec((tb, D), lambda i: (i, 0))

    out = pl.pallas_call(
        kernel,
        out_shape=jax.ShapeDtypeStruct((1, 1), jnp.float32),
        grid_spec=pltpu.PrefetchScalarGridSpec(
            num_scalar_prefetch=0,
            grid=(grid_b,),
            in_specs=[in_spec, in_spec, in_spec],
            out_specs=pl.BlockSpec((1, 1), lambda i: (0, 0)),
            scratch_shapes=[
                pltpu.VMEM((1, 1), jnp.float32),   # sum of positive norms
                pltpu.VMEM((1, 1), jnp.float32),   # sum of negative norms
            ],
        ),
        compiler_params=pltpu.CompilerParams(
            # Batch axis carries the accumulator -> must be "arbitrary".
            dimension_semantics=("arbitrary",),
        ),
    )(x, p, n)
    return out[0, 0]


def triplet_loss_ref(x, p, n, alpha: float = 1.0, beta: float = 0.1):
    """Plain-JAX reference mirroring the PyTorch module."""
    pos_dist = jnp.mean(jnp.linalg.norm(x - p, axis=1))
    neg_dist = jnp.mean(jnp.linalg.norm(x - n, axis=1))
    loss = jnp.maximum(pos_dist - neg_dist + alpha, 0.0)
    loss = loss + jnp.maximum(pos_dist - beta, 0.0)
    return loss


if __name__ == "__main__":
    key = jax.random.PRNGKey(0)
    kx, kp, kn = jax.random.split(key, 3)

    B, D = 8, 32  # small shapes: batch of 8 embeddings, hidden=32
    x = jax.random.normal(kx, (B, D), dtype=jnp.float32)
    p = jax.random.normal(kp, (B, D), dtype=jnp.float32)
    n = jax.random.normal(kn, (B, D), dtype=jnp.float32)

    out = triplet_loss(x, p, n, alpha=1.0, beta=0.1)
    out = jax.block_until_ready(out)

    ref = triplet_loss_ref(x, p, n, alpha=1.0, beta=0.1)
    assert jnp.allclose(out, ref, rtol=1e-5, atol=1e-5), (out, ref)

    print("KERNEL_OK")
</pallas_src>

<mosaic_0001>
module attributes {stable_mosaic.version = 11 : i64} {
  func.func @_triplet_kernel(%arg0: i32, %arg1: memref<8x32xf32, #tpu.memory_space<vmem>>, %arg2: memref<8x32xf32, #tpu.memory_space<vmem>>, %arg3: memref<8x32xf32, #tpu.memory_space<vmem>>, %arg4: memref<1x1xf32, #tpu.memory_space<vmem>>, %arg5: memref<1x1xf32, #tpu.memory_space<vmem>>, %arg6: memref<1x1xf32, #tpu.memory_space<vmem>>) attributes {dimension_semantics = [#tpu.dimension_semantics<arbitrary>], iteration_bounds = array<i64: 1>, scalar_prefetch = 0 : i64, scratch_operands = 2 : i64, tpu.core_type = #tpu.core_type<tc>, window_params = [{transform_indices = @transform_0, window_bounds = array<i64: 8, 32>}, {transform_indices = @transform_1, window_bounds = array<i64: 8, 32>}, {transform_indices = @transform_2, window_bounds = array<i64: 8, 32>}, {pipeline_mode = #tpu.pipeline_mode<synchronous>, transform_indices = @transform_3, window_bounds = array<i64: 1, 1>}]} {
    %c0_i32 = arith.constant 0 : i32
    %0 = arith.cmpi eq, %arg0, %c0_i32 : i32
    %1 = arith.extui %0 : i1 to i32
    %c0_i32_0 = arith.constant 0 : i32
    %2 = arith.cmpi ne, %1, %c0_i32_0 : i32
    scf.if %2 {
      %cst_22 = arith.constant 0.000000e+00 : f32
      %45 = vector.broadcast %cst_22 : f32 to vector<1x1xf32>
      %c0_23 = arith.constant 0 : index
      %c0_24 = arith.constant 0 : index
      %46 = vector.load %arg5[%c0_23, %c0_24] : memref<1x1xf32, #tpu.memory_space<vmem>>, vector<1x1xf32>
      tpu.vector_store %arg5[%c0_23, %c0_24], %45 {strides = array<i32>} : memref<1x1xf32, #tpu.memory_space<vmem>>, vector<1x1xf32>,
      %cst_25 = arith.constant 0.000000e+00 : f32
      %47 = vector.broadcast %cst_25 : f32 to vector<1x1xf32>
      %c0_26 = arith.constant 0 : index
      %c0_27 = arith.constant 0 : index
      %48 = vector.load %arg6[%c0_26, %c0_27] : memref<1x1xf32, #tpu.memory_space<vmem>>, vector<1x1xf32>
      tpu.vector_store %arg6[%c0_26, %c0_27], %47 {strides = array<i32>} : memref<1x1xf32, #tpu.memory_space<vmem>>, vector<1x1xf32>,
    } else {
    }
    %c0 = arith.constant 0 : index
    %c0_1 = arith.constant 0 : index
    %3 = vector.load %arg1[%c0, %c0_1] : memref<8x32xf32, #tpu.memory_space<vmem>>, vector<8x32xf32>
    %c0_2 = arith.constant 0 : index
    %c0_3 = arith.constant 0 : index
    %4 = vector.load %arg2[%c0_2, %c0_3] : memref<8x32xf32, #tpu.memory_space<vmem>>, vector<8x32xf32>
    %c0_4 = arith.constant 0 : index
    %c0_5 = arith.constant 0 : index
    %5 = vector.load %arg3[%c0_4, %c0_5] : memref<8x32xf32, #tpu.memory_space<vmem>>, vector<8x32xf32>
    %6 = arith.subf %3, %4 : vector<8x32xf32>
    %7 = arith.subf %3, %5 : vector<8x32xf32>
    %8 = arith.mulf %6, %6 : vector<8x32xf32>
    %cst = arith.constant dense<0.000000e+00> : vector<8xf32>
    %9 = vector.multi_reduction <add>, %8, %cst [1] : vector<8x32xf32> to vector<8xf32>
    %10 = vector.shape_cast %9 : vector<8xf32> to vector<8x1xf32>
    %11 = arith.mulf %7, %7 : vector<8x32xf32>
    %cst_6 = arith.constant dense<0.000000e+00> : vector<8xf32>
    %12 = vector.multi_reduction <add>, %11, %cst_6 [1] : vector<8x32xf32> to vector<8xf32>
    %13 = vector.shape_cast %12 : vector<8xf32> to vector<8x1xf32>
    %c8_i32 = arith.constant 8 : i32
    %14 = arith.muli %arg0, %c8_i32 : i32
    %15 = tpu.iota {dimensions = array<i32: 0>} : vector<8x1xi32>
    %16 = vector.broadcast %14 : i32 to vector<8x1xi32>
    %17 = arith.addi %16, %15 : vector<8x1xi32>
    %c8_i32_7 = arith.constant 8 : i32
    %18 = vector.broadcast %c8_i32_7 : i32 to vector<8x1xi32>
    %19 = arith.cmpi slt, %17, %18 : vector<8x1xi32>
    %20 = math.sqrt %10 : vector<8x1xf32>
    %cst_8 = arith.constant 0.000000e+00 : f32
    %21 = vector.broadcast %cst_8 : f32 to vector<8x1xf32>
    %22 = arith.select %19, %20, %21 : vector<8x1xi1>, vector<8x1xf32>
    %23 = math.sqrt %13 : vector<8x1xf32>
    %cst_9 = arith.constant 0.000000e+00 : f32
    %24 = vector.broadcast %cst_9 : f32 to vector<8x1xf32>
    %25 = arith.select %19, %23, %24 : vector<8x1xi1>, vector<8x1xf32>
    %c0_10 = arith.constant 0 : index
    %c0_11 = arith.constant 0 : index
    %26 = vector.load %arg5[%c0_10, %c0_11] : memref<1x1xf32, #tpu.memory_space<vmem>>, vector<1x1xf32>
    %27 = vector.shape_cast %22 : vector<8x1xf32> to vector<1x8x1xf32>
    %cst_12 = arith.constant dense<0.000000e+00> : vector<1xf32>
    %28 = vector.multi_reduction <add>, %27, %cst_12 [1, 2] : vector<1x8x1xf32> to vector<1xf32>
    %29 = vector.shape_cast %28 : vector<1xf32> to vector<1x1x1xf32>
    %30 = vector.extract %29[0, 0, 0] : f32 from vector<1x1x1xf32>
    %31 = vector.broadcast %30 : f32 to vector<1x1xf32>
    %32 = arith.addf %26, %31 : vector<1x1xf32>
    %c0_13 = arith.constant 0 : index
    %c0_14 = arith.constant 0 : index
    %33 = vector.load %arg5[%c0_13, %c0_14] : memref<1x1xf32, #tpu.memory_space<vmem>>, vector<1x1xf32>
    tpu.vector_store %arg5[%c0_13, %c0_14], %32 {strides = array<i32>} : memref<1x1xf32, #tpu.memory_space<vmem>>, vector<1x1xf32>,
    %c0_15 = arith.constant 0 : index
    %c0_16 = arith.constant 0 : index
    %34 = vector.load %arg6[%c0_15, %c0_16] : memref<1x1xf32, #tpu.memory_space<vmem>>, vector<1x1xf32>
    %35 = vector.shape_cast %25 : vector<8x1xf32> to vector<1x8x1xf32>
    %cst_17 = arith.constant dense<0.000000e+00> : vector<1xf32>
    %36 = vector.multi_reduction <add>, %35, %cst_17 [1, 2] : vector<1x8x1xf32> to vector<1xf32>
    %37 = vector.shape_cast %36 : vector<1xf32> to vector<1x1x1xf32>
    %38 = vector.extract %37[0, 0, 0] : f32 from vector<1x1x1xf32>
    %39 = vector.broadcast %38 : f32 to vector<1x1xf32>
    %40 = arith.addf %34, %39 : vector<1x1xf32>
    %c0_18 = arith.constant 0 : index
    %c0_19 = arith.constant 0 : index
    %41 = vector.load %arg6[%c0_18, %c0_19] : memref<1x1xf32, #tpu.memory_space<vmem>>, vector<1x1xf32>
    tpu.vector_store %arg6[%c0_18, %c0_19], %40 {strides = array<i32>} : memref<1x1xf32, #tpu.memory_space<vmem>>, vector<1x1xf32>,
    %c0_i32_20 = arith.constant 0 : i32
    %42 = arith.cmpi eq, %arg0, %c0_i32_20 : i32
    %43 = arith.extui %42 : i1 to i32
    %c0_i32_21 = arith.constant 0 : i32
    %44 = arith.cmpi ne, %43, %c0_i32_21 : i32
    scf.if %44 {
      %c0_22 = arith.constant 0 : index
      %c0_23 = arith.constant 0 : index
      %45 = vector.load %arg5[%c0_22, %c0_23] : memref<1x1xf32, #tpu.memory_space<vmem>>, vector<1x1xf32>
      %cst_24 = arith.constant 1.250000e-01 : f32
      %46 = vector.broadcast %cst_24 : f32 to vector<1x1xf32>
      %47 = arith.mulf %45, %46 : vector<1x1xf32>
      %c0_25 = arith.constant 0 : index
      %c0_26 = arith.constant 0 : index
      %48 = vector.load %arg6[%c0_25, %c0_26] : memref<1x1xf32, #tpu.memory_space<vmem>>, vector<1x1xf32>
      %cst_27 = arith.constant 1.250000e-01 : f32
      %49 = vector.broadcast %cst_27 : f32 to vector<1x1xf32>
      %50 = arith.mulf %48, %49 : vector<1x1xf32>
      %51 = arith.subf %47, %50 : vector<1x1xf32>
      %cst_28 = arith.constant 1.000000e+00 : f32
      %52 = vector.broadcast %cst_28 : f32 to vector<1x1xf32>
      %53 = arith.addf %51, %52 : vector<1x1xf32>
      %cst_29 = arith.constant 0.000000e+00 : f32
      %54 = vector.broadcast %cst_29 : f32 to vector<1x1xf32>
      %55 = arith.maximumf %53, %54 : vector<1x1xf32>
      %cst_30 = arith.constant 1.000000e-01 : f32
      %56 = vector.broadcast %cst_30 : f32 to vector<1x1xf32>
      %57 = arith.subf %47, %56 : vector<1x1xf32>
      %cst_31 = arith.constant 0.000000e+00 : f32
      %58 = vector.broadcast %cst_31 : f32 to vector<1x1xf32>
      %59 = arith.maximumf %57, %58 : vector<1x1xf32>
      %60 = arith.addf %55, %59 : vector<1x1xf32>
      %c0_32 = arith.constant 0 : index
      %c0_33 = arith.constant 0 : index
      %61 = vector.load %arg4[%c0_32, %c0_33] : memref<1x1xf32, #tpu.memory_space<vmem>>, vector<1x1xf32>
      tpu.vector_store %arg4[%c0_32, %c0_33], %60 {strides = array<i32>} : memref<1x1xf32, #tpu.memory_space<vmem>>, vector<1x1xf32>,
    } else {
    }
    return
  }
  func.func @transform_0(%arg0: i32) -> (i32, i32) {
    %c0_i32 = arith.constant 0 : i32
    %c0_i32_0 = arith.constant 0 : i32
    return %arg0, %c0_i32 : i32, i32
  }
  func.func @transform_1(%arg0: i32) -> (i32, i32) {
    %c0_i32 = arith.constant 0 : i32
    %c0_i32_0 = arith.constant 0 : i32
    return %arg0, %c0_i32 : i32, i32
  }
  func.func @transform_2(%arg0: i32) -> (i32, i32) {
    %c0_i32 = arith.constant 0 : i32
    %c0_i32_0 = arith.constant 0 : i32
    return %arg0, %c0_i32 : i32, i32
  }
  func.func @transform_3(%arg0: i32) -> (i32, i32) {
    %c0_i32 = arith.constant 0 : i32
    %c0_i32_0 = arith.constant 0 : i32
    %c0_i32_1 = arith.constant 0 : i32
    return %c0_i32, %c0_i32_0 : i32, i32
  }
}

</mosaic_0001>

<llo_original>
// kernel: tpu_custom_call.1
$region0: #{tpu_custom_call.1}
  #allocation0 [shape = 'u32[]', space=smem, size = 0x4, offset = 0x4, fixed_abs, tag = 'smem constant byte address 0x4 - core index']
  #allocation1 [shape = 'u32[72,128]{1,0:T(1,128)}', space=vmem, size = 0x9000, scoped, tag = 'internal scratch']
  #allocation2 [shape = 'f32[1,1]{1,0:T(1,128)}', space=vmem, size = 0x200, scoped, tag = 'scratch operand']
  #allocation3 [shape = 'f32[1,1]{1,0:T(1,128)}', space=vmem, size = 0x200, scoped, tag = 'scratch operand']
  %s0 = inlined_call_operand.hbm [shape: f32[8,32], index: 0, kind: input, shape index: {}]
  %s1 = inlined_call_operand.hbm [shape: f32[8,32], index: 1, kind: input, shape index: {}]
  %s2 = inlined_call_operand.hbm [shape: f32[8,32], index: 2, kind: input, shape index: {}]
  %s3 = inlined_call_operand.hbm [shape: f32[1,1], index: 3, kind: output, shape index: {}]
  %s4 = sld [smem:[#allocation0]]
  $region42: #{tpu_custom_call.1} parent=0
    _
  %s6 = ssub.s32 1, %s4
  %s7 = scalar_select 0, %s6, %s4
  $region1: #{tpu_custom_call.1} parent=0
    #allocation4 [shape = 'u8[4096]{0}', space=vmem, size = 0x1000, scoped, tag = 'input window, operand 0, single buffered']
    #allocation5 [shape = 's32[1]{0}', space=sflag, size = 0x4, scoped, tag = 'scoped memory for tpu_custom_call.1']
    #allocation6 [shape = 's32[1]{0}', space=sflag, size = 0x4, scoped, tag = 'scoped memory for tpu_custom_call.1']
    #allocation7 [shape = 'u8[4096]{0}', space=vmem, size = 0x1000, scoped, tag = 'input window, operand 1, single buffered']
    #allocation8 [shape = 's32[1]{0}', space=sflag, size = 0x4, scoped, tag = 'scoped memory for tpu_custom_call.1']
    #allocation9 [shape = 'u8[4096]{0}', space=vmem, size = 0x1000, scoped, tag = 'input window, operand 2, single buffered']
    #allocation10 [shape = 'u8[512]{0}', space=vmem, size = 0x400, scoped, tag = 'output window, operand 0, single buffered']
    %8 = vsyncpa [#allocation5], 0
    %9 = vsyncpa [#allocation8], 0
    %10 = vsyncpa [#allocation6], 0
    // Predicated region
    $region2: #{tpu_custom_call.1} parent=1 // pred_check
      _
    $region3: #{tpu_custom_call.1} parent=1 // pred_check_branch
      %12 = sbr.rel (0) target = $region5
    $region4: #{tpu_custom_call.1} parent=1 // pred_region
      %14 = vsyncadd [#allocation5], 0
      %s16 = sshll.u32 %s0, 4
      %s17 = int_to_ptr.hbm [resolvable:$true] %s16
      %s18 = sshll.u32 [#allocation4], 4
      %s19 = int_to_ptr.vmem [resolvable:$true] %s18
      %21 = dma.hbm_to_vmem [thread:$0]  %s17, 128, %s19, [#allocation5]
    $region5: #{tpu_custom_call.1} parent=1 // pred_fallthru
      _
    // Predicated region
    $region6: #{tpu_custom_call.1} parent=1 // pred_check
      _
    $region7: #{tpu_custom_call.1} parent=1 // pred_check_branch
      %23 = sbr.rel (0) target = $region9
    $region8: #{tpu_custom_call.1} parent=1 // pred_region
      %25 = vsyncadd [#allocation8], 0
      %s27 = sshll.u32 %s1, 4
      %s28 = int_to_ptr.hbm [resolvable:$true] %s27
      %s29 = sshll.u32 [#allocation7], 4
      %s30 = int_to_ptr.vmem [resolvable:$true] %s29
      %32 = dma.hbm_to_vmem [thread:$0]  %s28, 128, %s30, [#allocation8]
    $region9: #{tpu_custom_call.1} parent=1 // pred_fallthru
      _
    // Predicated region
    $region10: #{tpu_custom_call.1} parent=1 // pred_check
      _
    $region11: #{tpu_custom_call.1} parent=1 // pred_check_branch
      %34 = sbr.rel (0) target = $region13
    $region12: #{tpu_custom_call.1} parent=1 // pred_region
      %36 = vsyncadd [#allocation8], 0
      %s38 = sshll.u32 %s2, 4
      %s39 = int_to_ptr.hbm [resolvable:$true] %s38
      %s40 = sshll.u32 [#allocation9], 4
      %s41 = int_to_ptr.vmem [resolvable:$true] %s40
      %43 = dma.hbm_to_vmem [thread:$0]  %s39, 128, %s41, [#allocation8]
    $region13: #{tpu_custom_call.1} parent=1 // pred_fallthru
      _
    // Predicated region
    $region14: #{tpu_custom_call.1} parent=1 // pred_check
      _
    $region15: #{tpu_custom_call.1} parent=1 // pred_check_branch
      %45 = sbr.rel (0) target = $region17
    $region16: #{tpu_custom_call.1} parent=1 // pred_region
      %47 = dma.done [#allocation5], 128
    $region17: #{tpu_custom_call.1} parent=1 // pred_fallthru
      _
    // Predicated region
    $region18: #{tpu_custom_call.1} parent=1 // pred_check
      _
    $region19: #{tpu_custom_call.1} parent=1 // pred_check_branch
      %49 = sbr.rel (0) target = $region21
    $region20: #{tpu_custom_call.1} parent=1 // pred_region
      %51 = dma.done [#allocation8], 128
    $region21: #{tpu_custom_call.1} parent=1 // pred_fallthru
      _
    // Predicated region
    $region22: #{tpu_custom_call.1} parent=1 // pred_check
      _
    $region23: #{tpu_custom_call.1} parent=1 // pred_check_branch
      %53 = sbr.rel (0) target = $region25
    $region24: #{tpu_custom_call.1} parent=1 // pred_region
      %55 = dma.done [#allocation8], 128
    $region25: #{tpu_custom_call.1} parent=1 // pred_fallthru
      _
    %p56 = scmp.eq.s32.totalorder 0, 0
    // Predicated region
    $region26: #{tpu_custom_call.1} parent=1 // pred_check
      %p57 = pneg %p56
    $region27: #{tpu_custom_call.1} parent=1 // pred_check_branch
      %59 = sbr.rel (%p57) target = $region29
    $region28: #{tpu_custom_call.1} parent=1 // pred_region
      %vm60 = vcmask 0
      %61 = vst.msk [vmem:[#allocation2] sm:$0x1] %vm60, 0.0
      %62 = vst.msk [vmem:[#allocation3] sm:$0x1] %vm60, 0.0
    $region29: #{tpu_custom_call.1} parent=1 // pred_fallthru
      _
    %v63 = vld [vmem:[#allocation4] sm:$0xff]
    %v64 = vld [vmem:[#allocation7] sm:$0xff]
    %v65 = vld [vmem:[#allocation9] sm:$0xff]
    %v66 = vsub.f32 %v63, %v64
    %v67 = vsub.f32 %v63, %v65
    %v68 = vmul.f32 %v66, %v66
    %vm69 = vcmask 261120
    %v70 = vsel %vm69, %v68, 0.0
    %71 = vadd.xlane.f32.xlu0 %v70
    %v72 = vpop.xlane.xlu0 %71
    %v73 = vmul.f32 %v67, %v67
    %v74 = vsel %vm69, %v73, 0.0
    %75 = vadd.xlane.f32.xlu0 %v74
    %v76 = vpop.xlane.xlu0 %75
    %s77 = smul.u32 0, 8
    %v78 = vlaneseq
    %v79 = vshrl.u32 %v78, 7
    %v80 = vstv %s77
    %v81 = vadd.s32 %v80, %v79
    %vm82 = vcmp.lt.s32.totalorder %v81, 8
    %v83 = vrsqrt.pop %v72
    %v84 = vmul.f32 %v83, %v72
    %v85 = vmul.f32 %v84, %v83
    %v86 = vmul.f32 0.5, %v85
    %v87 = vsub.f32 1.5, %v86
    %v88 = vmul.f32 %v83, %v87
    %v89 = vmul.f32 %v72, %v88
    %vm90 = vcmp.eq.f32.partialorder %v72, inf
    %v91 = vsel %vm90, %v72, %v89
    %vm92 = vcmp.eq.f32.partialorder %v72, 0.0
    %v93 = vand.u32 %v72, 2147483648
    %v94 = vsel %vm92, %v93, %v91
    %v95 = vsel %vm82, %v94, 0.0
    %v96 = vrsqrt.pop %v76
    %v97 = vmul.f32 %v96, %v76
    %v98 = vmul.f32 %v97, %v96
    %v99 = vmul.f32 0.5, %v98
    %v100 = vsub.f32 1.5, %v99
    %v101 = vmul.f32 %v96, %v100
    %v102 = vmul.f32 %v76, %v101
    %vm103 = vcmp.eq.f32.partialorder %v76, inf
    %v104 = vsel %vm103, %v76, %v102
    %vm105 = vcmp.eq.f32.partialorder %v76, 0.0
    %v106 = vand.u32 %v76, 2147483648
    %v107 = vsel %vm105, %v106, %v104
    %v108 = vsel %vm82, %v107, 0.0
    %v109 = vld [vmem:[#allocation2] sm:$0x1]
    %vm110 = vcmask 7168
    %v111 = vsel %vm110, %v95, 0.0
    %112 = vadd.xlane.f32.xlu0 %v111
    %v113 = vpop.xlane.xlu0 %112
    %v114 = vrot.slane %v113, 4
    %v115 = vadd.f32 %v113, %v114
    %v116 = vrot.slane %v115, 2
    %v117 = vadd.f32 %v115, %v116
    %v118 = vrot.slane %v117, 1
    %v119 = vadd.f32 %v117, %v118
    %s120 = vtos %v119
    %v121 = vstv %s120
    %v122 = vadd.f32 %v109, %v121
    %vm123 = vcmask 0
    %124 = vst.msk [vmem:[#allocation2] sm:$0x1] %vm123, %v122
    %v125 = vld [vmem:[#allocation3] sm:$0x1]
    %v126 = vsel %vm110, %v108, 0.0
    %127 = vadd.xlane.f32.xlu0 %v126
    %v128 = vpop.xlane.xlu0 %127
    %v129 = vrot.slane %v128, 4
    %v130 = vadd.f32 %v128, %v129
    %v131 = vrot.slane %v130, 2
    %v132 = vadd.f32 %v130, %v131
    %v133 = vrot.slane %v132, 1
    %v134 = vadd.f32 %v132, %v133
    %s135 = vtos %v134
    %v136 = vstv %s135
    %v137 = vadd.f32 %v125, %v136
    %138 = vst.msk [vmem:[#allocation3] sm:$0x1] %vm123, %v137
    // Predicated region
    $region30: #{tpu_custom_call.1} parent=1 // pred_check
      %p139 = pneg %p56
    $region31: #{tpu_custom_call.1} parent=1 // pred_check_branch
      %141 = sbr.rel (%p139) target = $region33
    $region32: #{tpu_custom_call.1} parent=1 // pred_region
      %v142 = vld [vmem:[#allocation2] sm:$0x1]
      %v143 = vmul.f32 %v142, 0.125
      %v144 = vld [vmem:[#allocation3] sm:$0x1]
      %v145 = vmul.f32 %v144, 0.125
      %v146 = vsub.f32 %v143, %v145
      %v147 = vadd.f32 %v146, 1.0
      %v148 = vmax.f32 %v147, 0.0
      %v149 = vsub.f32 %v143, 0.1
      %v150 = vmax.f32 %v149, 0.0
      %v151 = vadd.f32 %v148, %v150
      %152 = vst.msk [vmem:[#allocation10] sm:$0x1] %vm123, %v151
    $region33: #{tpu_custom_call.1} parent=1 // pred_fallthru
      _
    // Predicated region
    $region34: #{tpu_custom_call.1} parent=1 // pred_check
      _
    $region35: #{tpu_custom_call.1} parent=1 // pred_check_branch
      %154 = sbr.rel (0) target = $region37
    $region36: #{tpu_custom_call.1} parent=1 // pred_region
      %156 = vsyncadd [#allocation6], 0
      %s158 = sshll.u32 [#allocation10], 4
      %s159 = int_to_ptr.vmem [resolvable:$true] %s158
      %s160 = sshll.u32 %s3, 4
      %s161 = int_to_ptr.hbm [resolvable:$true] %s160
      %163 = dma.vmem_to_hbm [thread:$0]  %s159, 16, %s161, [#allocation6]
    $region37: #{tpu_custom_call.1} parent=1 // pred_fallthru
      _
    // Predicated region
    $region38: #{tpu_custom_call.1} parent=1 // pred_check
      _
    $region39: #{tpu_custom_call.1} parent=1 // pred_check_branch
      %165 = sbr.rel (0) target = $region41
    $region40: #{tpu_custom_call.1} parent=1 // pred_region
      %167 = dma.done [#allocation6], 16
    $region41: #{tpu_custom_call.1} parent=1 // pred_fallthru
      _
    %168 = vsyncpa [#allocation5], 1
    %169 = vsyncpa [#allocation8], 1
    %170 = vsyncpa [#allocation6], 1

</llo_original>
